<compile_context>
chip_gen: v7x
topology: tpu7x:2x2x1
jax: 0.10.0
libtpu: 0.0.40
codegen_flags: <defaults>
</compile_context>

<pallas_src>
import jax
import jax.numpy as jnp
from jax.experimental import pallas as pl
from jax.experimental.pallas import tpu as pltpu

_LANES = 128


def mlp_kernel(x_ref, w1_ref, b1_ref, w2_ref, b2_ref, o_ref):
    """tanh(tanh(x @ W1 + b1) @ W2 + b2) on one (batch-tile, feature) block."""
    x = x_ref[...]

    # fc1: matmul on MXU (f32 accumulate), bias broadcast on VPU, tanh on EUP.
    h = jnp.dot(x, w1_ref[...], preferred_element_type=jnp.float32)
    h = jnp.tanh(h + b1_ref[...])

    # fc2 + output activation. W2/b2 arrive lane-padded to a multiple of 128
    # (zero columns), so the store below is a full-lane (unmasked) write.
    y = jnp.dot(h, w2_ref[...], preferred_element_type=jnp.float32)
    y = jnp.tanh(y + b2_ref[...])

    o_ref[...] = y.astype(o_ref.dtype)


def continuous_policy_forward(x, w1, b1, w2, b2, *, block_m=512):
    """x: (B, obs), w1: (obs, hidden), b1: (1, hidden),
       w2: (hidden, action), b2: (1, action) -> (B, action) float32."""
    B, obs = x.shape
    hidden = w1.shape[1]
    action = w2.shape[1]

    # Lane-dense output: zero-pad the output feature dim up to 128 lanes so
    # writeback lowers to unmasked full-lane stores. tanh(0 + 0) columns are
    # sliced off outside the kernel.
    padded_action = max(_LANES, ((action + _LANES - 1) // _LANES) * _LANES)
    if padded_action != action:
        w2p = jnp.zeros((hidden, padded_action), w2.dtype).at[:, :action].set(w2)
        b2p = jnp.zeros((1, padded_action), b2.dtype).at[:, :action].set(b2)
    else:
        w2p, b2p = w2, b2

    if B <= block_m:
        # Single-block case: no grid -> no per-step pipeline bookkeeping.
        # Whole arrays live in VMEM (they are tiny).
        vmem_spec = pl.BlockSpec(memory_space=pltpu.MemorySpace.VMEM)
        out = pl.pallas_call(
            mlp_kernel,
            out_shape=jax.ShapeDtypeStruct((B, padded_action), jnp.float32),
            in_specs=[vmem_spec] * 5,
            out_specs=vmem_spec,
        )(x, w1, b1, w2p, b2p)
        return out[:, :action]

    # Large-batch path: tile over batch; weights/biases stay VMEM-resident
    # (constant block index) while x/out tiles stream with double-buffering.
    padded_B = ((B + block_m - 1) // block_m) * block_m
    xp = x if padded_B == B else (
        jnp.zeros((padded_B, obs), x.dtype).at[:B].set(x))

    out = pl.pallas_call(
        mlp_kernel,
        out_shape=jax.ShapeDtypeStruct((padded_B, padded_action), jnp.float32),
        grid_spec=pltpu.PrefetchScalarGridSpec(
            num_scalar_prefetch=0,
            grid=(padded_B // block_m,),
            in_specs=[
                pl.BlockSpec((block_m, obs), lambda i: (i, 0)),
                pl.BlockSpec((obs, hidden), lambda i: (0, 0)),
                pl.BlockSpec((1, hidden), lambda i: (0, 0)),
                pl.BlockSpec((hidden, padded_action), lambda i: (0, 0)),
                pl.BlockSpec((1, padded_action), lambda i: (0, 0)),
            ],
            out_specs=pl.BlockSpec((block_m, padded_action),
                                   lambda i: (i, 0)),
        ),
        compiler_params=pltpu.CompilerParams(
            dimension_semantics=("parallel",)),  # shards across v7x's 2 TCs
    )(xp, w1, b1, w2p, b2p)
    return out[:B, :action]


def init_params(key, obs, hidden, action):
    """Deterministic synthetic init mirroring nn.Linear shapes (stored as
    (in, out) so the kernel computes x @ W)."""
    k1, k2, k3, k4 = jax.random.split(key, 4)
    lim1 = 1.0 / jnp.sqrt(obs)
    lim2 = 1.0 / jnp.sqrt(hidden)
    w1 = jax.random.uniform(k1, (obs, hidden), jnp.float32, -lim1, lim1)
    b1 = jax.random.uniform(k2, (1, hidden), jnp.float32, -lim1, lim1)
    w2 = jax.random.uniform(k3, (hidden, action), jnp.float32, -lim2, lim2)
    b2 = jax.random.uniform(k4, (1, action), jnp.float32, -lim2, lim2)
    return w1, b1, w2, b2


if __name__ == "__main__":
    # config equivalent: observation_space=16, hidden_nodes=32, action_space=8,
    # fc1_activation_func='Tanh', output_activation_func='Tanh'
    obs, hidden, action = 16, 32, 8

    key = jax.random.PRNGKey(0)
    kx, kp, kx2 = jax.random.split(key, 3)
    w1, b1, w2, b2 = init_params(kp, obs, hidden, action)

    # --- tiny single-block (no-grid) path, like a single policy step ---
    batch = 2
    x = jax.random.normal(kx, (batch, obs), jnp.float32)
    out = jax.block_until_ready(continuous_policy_forward(x, w1, b1, w2, b2))
    ref = jnp.tanh(jnp.tanh(x @ w1 + b1) @ w2 + b2)
    assert out.shape == (batch, action)
    assert jnp.allclose(out, ref, atol=1e-5, rtol=1e-5)

    # --- batch-tiled path (RL rollout sizes), exercises padding + resident
    #     weights + "parallel" batch semantics ---
    big_batch = 640  # not a multiple of block_m -> exercises batch padding
    xb = jax.random.normal(kx2, (big_batch, obs), jnp.float32)
    outb = jax.block_until_ready(
        continuous_policy_forward(xb, w1, b1, w2, b2, block_m=512))
    refb = jnp.tanh(jnp.tanh(xb @ w1 + b1) @ w2 + b2)
    assert outb.shape == (big_batch, action)
    assert jnp.allclose(outb, refb, atol=1e-5, rtol=1e-5)

    # TODO(synk): the PyTorch module's `.cpu().data` host transfer and the
    # set_weights/get_weights helpers are host-side utilities with no kernel
    # equivalent; only the numerical forward pass is implemented here.
    print("KERNEL_OK")
</pallas_src>

<mosaic_0001>
module attributes {stable_mosaic.version = 11 : i64} {
  func.func @mlp_kernel(%arg0: memref<2x16xf32, #tpu.memory_space<vmem>>, %arg1: memref<16x32xf32, #tpu.memory_space<vmem>>, %arg2: memref<1x32xf32, #tpu.memory_space<vmem>>, %arg3: memref<32x128xf32, #tpu.memory_space<vmem>>, %arg4: memref<1x128xf32, #tpu.memory_space<vmem>>, %arg5: memref<2x128xf32, #tpu.memory_space<vmem>>) attributes {dimension_semantics = [], scalar_prefetch = 0 : i64, scratch_operands = 0 : i64, tpu.core_type = #tpu.core_type<tc>} {
    %c0 = arith.constant 0 : index
    %c0_0 = arith.constant 0 : index
    %0 = vector.load %arg0[%c0, %c0_0] : memref<2x16xf32, #tpu.memory_space<vmem>>, vector<2x16xf32>
    %c0_1 = arith.constant 0 : index
    %c0_2 = arith.constant 0 : index
    %1 = vector.load %arg1[%c0_1, %c0_2] : memref<16x32xf32, #tpu.memory_space<vmem>>, vector<16x32xf32>
    %cst = arith.constant dense<0.000000e+00> : vector<2x32xf32>
    %2 = tpu.matmul %0, %1, %cst {dimension_numbers = #tpu.dot_dimension_numbers<[1], [0], [0], [1], [0, 0, 1, 1], [], []>} : vector<2x16xf32>, vector<16x32xf32>, vector<2x32xf32> -> vector<2x32xf32>
    %c0_3 = arith.constant 0 : index
    %c0_4 = arith.constant 0 : index
    %3 = vector.load %arg2[%c0_3, %c0_4] : memref<1x32xf32, #tpu.memory_space<vmem>>, vector<1x32xf32>
    %4 = vector.broadcast %3 : vector<1x32xf32> to vector<2x32xf32>
    %5 = arith.addf %2, %4 : vector<2x32xf32>
    %6 = math.tanh %5 : vector<2x32xf32>
    %c0_5 = arith.constant 0 : index
    %c0_6 = arith.constant 0 : index
    %7 = vector.load %arg3[%c0_5, %c0_6] : memref<32x128xf32, #tpu.memory_space<vmem>>, vector<32x128xf32>
    %cst_7 = arith.constant dense<0.000000e+00> : vector<2x128xf32>
    %8 = tpu.matmul %6, %7, %cst_7 {dimension_numbers = #tpu.dot_dimension_numbers<[1], [0], [0], [1], [0, 0, 1, 1], [], []>} : vector<2x32xf32>, vector<32x128xf32>, vector<2x128xf32> -> vector<2x128xf32>
    %c0_8 = arith.constant 0 : index
    %c0_9 = arith.constant 0 : index
    %9 = vector.load %arg4[%c0_8, %c0_9] : memref<1x128xf32, #tpu.memory_space<vmem>>, vector<1x128xf32>
    %10 = vector.broadcast %9 : vector<1x128xf32> to vector<2x128xf32>
    %11 = arith.addf %8, %10 : vector<2x128xf32>
    %12 = math.tanh %11 : vector<2x128xf32>
    %c0_10 = arith.constant 0 : index
    %c0_11 = arith.constant 0 : index
    %13 = vector.load %arg5[%c0_10, %c0_11] : memref<2x128xf32, #tpu.memory_space<vmem>>, vector<2x128xf32>
    tpu.vector_store %arg5[%c0_10, %c0_11], %12 {strides = array<i32>} : memref<2x128xf32, #tpu.memory_space<vmem>>, vector<2x128xf32>,
    return
  }
}

</mosaic_0001>

<llo_original>
// kernel: tpu_custom_call.1
$region0: #{tpu_custom_call.1}
  #allocation0 [shape = 'u32[]', space=smem, size = 0x4, offset = 0x4, fixed_abs, tag = 'smem constant byte address 0x4 - core index']
  #allocation1 [shape = 'u32[144,128]{1,0:T(1,128)}', space=vmem, size = 0x12000, scoped, tag = 'internal scratch']
  %s0 = inlined_call_operand.hbm [shape: f32[2,16], index: 0, kind: input, shape index: {}]
  %s1 = inlined_call_operand.hbm [shape: f32[16,32], index: 1, kind: input, shape index: {}]
  %s2 = inlined_call_operand.vmem [shape: f32[1,32], index: 2, kind: input, shape index: {}]
  %s3 = inlined_call_operand.hbm [shape: f32[32,128], index: 3, kind: input, shape index: {}]
  %s4 = inlined_call_operand.vmem [shape: f32[1,128], index: 4, kind: input, shape index: {}]
  %s5 = inlined_call_operand.hbm [shape: f32[2,128], index: 5, kind: output, shape index: {}]
  %s6 = sld [smem:[#allocation0]]
  $region42: #{tpu_custom_call.1} parent=0
    _
  %s8 = ssub.s32 1, %s6
  %s9 = scalar_select 0, %s8, %s6
  $region1: #{tpu_custom_call.1} parent=0
    #allocation2 [shape = 'u8[1024]{0}', space=vmem, size = 0x400, scoped, tag = 'input window, operand 0, single buffered']
    #allocation3 [shape = 's32[1]{0}', space=sflag, size = 0x4, scoped, tag = 'scoped memory for tpu_custom_call.1']
    #allocation4 [shape = 's32[1]{0}', space=sflag, size = 0x4, scoped, tag = 'scoped memory for tpu_custom_call.1']
    #allocation5 [shape = 'u8[8192]{0}', space=vmem, size = 0x2000, scoped, tag = 'input window, operand 1, single buffered']
    #allocation6 [shape = 's32[1]{0}', space=sflag, size = 0x4, scoped, tag = 'scoped memory for tpu_custom_call.1']
    #allocation7 [shape = 'u8[16384]{0}', space=vmem, size = 0x4000, scoped, tag = 'input window, operand 3, single buffered']
    #allocation8 [shape = 'u8[1024]{0}', space=vmem, size = 0x400, scoped, tag = 'output window, operand 0, single buffered']
    %10 = vsyncpa [#allocation3], 0
    %11 = vsyncpa [#allocation6], 0
    %12 = vsyncpa [#allocation4], 0
    // Predicated region
    $region2: #{tpu_custom_call.1} parent=1 // pred_check
      _
    $region3: #{tpu_custom_call.1} parent=1 // pred_check_branch
      %14 = sbr.rel (0) target = $region5
    $region4: #{tpu_custom_call.1} parent=1 // pred_region
      %s16 = ssub.s32 32, 32
      %17 = vsyncadd [#allocation3], %s16
      %s19 = sshll.u32 [#allocation2], 4
      %s20 = int_to_ptr.vmem [resolvable:$true] %s19
      %22 = dma.hbm_to_vmem [thread:$0]  %s0, 32, %s20, [#allocation3]
    $region5: #{tpu_custom_call.1} parent=1 // pred_fallthru
      _
    // Predicated region
    $region6: #{tpu_custom_call.1} parent=1 // pred_check
      _
    $region7: #{tpu_custom_call.1} parent=1 // pred_check_branch
      %24 = sbr.rel (0) target = $region9
    $region8: #{tpu_custom_call.1} parent=1 // pred_region
      %s26 = ssub.s32 256, 256
      %27 = vsyncadd [#allocation6], %s26
      %s28 = sshll.u32 [#allocation5], 4
      %s29 = int_to_ptr.vmem [resolvable:$true] %s28
      %34 = dma.hbm_to_vmem [thread:$0]  %s1, 256, %s29, [#allocation6], 128, 128, 8
    $region9: #{tpu_custom_call.1} parent=1 // pred_fallthru
      _
    // Predicated region
    $region10: #{tpu_custom_call.1} parent=1 // pred_check
      _
    $region11: #{tpu_custom_call.1} parent=1 // pred_check_branch
      %36 = sbr.rel (0) target = $region13
    $region12: #{tpu_custom_call.1} parent=1 // pred_region
      _
    $region13: #{tpu_custom_call.1} parent=1 // pred_fallthru
      _
    // Predicated region
    $region14: #{tpu_custom_call.1} parent=1 // pred_check
      _
    $region15: #{tpu_custom_call.1} parent=1 // pred_check_branch
      %38 = sbr.rel (0) target = $region17
    $region16: #{tpu_custom_call.1} parent=1 // pred_region
      %s40 = ssub.s32 512, 512
      %41 = vsyncadd [#allocation6], %s40
      %s42 = sshll.u32 [#allocation7], 4
      %s43 = int_to_ptr.vmem [resolvable:$true] %s42
      %48 = dma.hbm_to_vmem [thread:$0]  %s3, 512, %s43, [#allocation6], 128, 128, 8
    $region17: #{tpu_custom_call.1} parent=1 // pred_fallthru
      _
    // Predicated region
    $region18: #{tpu_custom_call.1} parent=1 // pred_check
      _
    $region19: #{tpu_custom_call.1} parent=1 // pred_check_branch
      %50 = sbr.rel (0) target = $region21
    $region20: #{tpu_custom_call.1} parent=1 // pred_region
      _
    $region21: #{tpu_custom_call.1} parent=1 // pred_fallthru
      _
    // Predicated region
    $region22: #{tpu_custom_call.1} parent=1 // pred_check
      _
    $region23: #{tpu_custom_call.1} parent=1 // pred_check_branch
      %52 = sbr.rel (0) target = $region25
    $region24: #{tpu_custom_call.1} parent=1 // pred_region
      %53 = dma.done [#allocation3], 32
    $region25: #{tpu_custom_call.1} parent=1 // pred_fallthru
      _
    // Predicated region
    $region26: #{tpu_custom_call.1} parent=1 // pred_check
      _
    $region27: #{tpu_custom_call.1} parent=1 // pred_check_branch
      %55 = sbr.rel (0) target = $region29
    $region28: #{tpu_custom_call.1} parent=1 // pred_region
      %56 = dma.done [#allocation6], 256
    $region29: #{tpu_custom_call.1} parent=1 // pred_fallthru
      _
    // Predicated region
    $region30: #{tpu_custom_call.1} parent=1 // pred_check
      _
    $region31: #{tpu_custom_call.1} parent=1 // pred_check_branch
      %58 = sbr.rel (0) target = $region33
    $region32: #{tpu_custom_call.1} parent=1 // pred_region
      %59 = dma.done [#allocation6], 512
    $region33: #{tpu_custom_call.1} parent=1 // pred_fallthru
      _
    %v60 = vld [vmem:[#allocation2] sm:$0x3]
    %v61 = vld [vmem:[#allocation5] sm:$0xff]
    %v62 = vld [vmem:[#allocation5 + $0x8] sm:$0xff]
    %v63 = vld [vmem:[%s2] sm:$0x1]
    %v65 = vlaneseq
    %v66 = vshrl.u32 %v65, 7
    %v67 = vsub.s32 0, %v66
    %v68 = vrot.slane %v63, %v67
    %vm70 = vcmask 130048
    %v72 = vsel %vm70, %v60, 0
    %74 = vmatprep.subr.mxu0 0.0
    %75 = vmatpush1.msra.mxu0 %v61
    %76 = vmatprep.subr.mxu0 0.0
    %77 = vmatpush1.msra.mxu0 %v62
    %78 = vmatprep.subr.mxu0 0.0
    %79 = vmatpush1.msra.mxu0 0.0
    %80 = vmatprep.subr.mxu0 0.0
    %81 = vmatpush1.msra.mxu0 0.0
    %82 = vmatprep.subr.mxu0 0.0
    %83 = vmatpush1.msra.mxu0 0.0
    %84 = vmatprep.subr.mxu0 0.0
    %85 = vmatpush1.msra.mxu0 0.0
    %86 = vmatprep.subr.mxu0 0.0
    %87 = vmatpush1.msra.mxu0 0.0
    %88 = vmatprep.subr.mxu0 0.0
    %89 = vmatpush1.msra.mxu0 0.0
    %90 = vmatprep.subr.mxu0 0.0
    %91 = vmatpush1.msra.mxu0 0.0
    %92 = vmatprep.subr.mxu0 0.0
    %93 = vmatpush1.msra.mxu0 0.0
    %94 = vmatprep.subr.mxu0 0.0
    %95 = vmatpush1.msra.mxu0 0.0
    %96 = vmatprep.subr.mxu0 0.0
    %97 = vmatpush1.msra.mxu0 0.0
    %98 = vmatprep.subr.mxu0 0.0
    %99 = vmatpush1.msra.mxu0 0.0
    %100 = vmatprep.subr.mxu0 0.0
    %101 = vmatpush1.msra.mxu0 0.0
    %102 = vmatprep.subr.mxu0 0.0
    %103 = vmatpush1.msra.mxu0 0.0
    %104 = vmatprep.subr.mxu0 0.0
    %105 = vmatpush1.msra.mxu0 0.0
    %106 = vmatprep.subr.mxu0 0.0
    %107 = vmatpush1.msra.mxu0 0.0
    %108 = vmatprep.subr.mxu0 0.0
    %109 = vmatpush1.msra.mxu0 0.0
    %110 = vmatprep.subr.mxu0 0.0
    %111 = vmatpush1.msra.mxu0 0.0
    %112 = vmatprep.subr.mxu0 0.0
    %113 = vmatpush1.msra.mxu0 0.0
    %114 = vmatprep.subr.mxu0 0.0
    %115 = vmatpush1.msra.mxu0 0.0
    %116 = vmatprep.subr.mxu0 0.0
    %117 = vmatpush1.msra.mxu0 0.0
    %118 = vmatprep.subr.mxu0 0.0
    %119 = vmatpush1.msra.mxu0 0.0
    %120 = vmatprep.subr.mxu0 0.0
    %121 = vmatpush1.msra.mxu0 0.0
    %122 = vmatprep.subr.mxu0 0.0
    %123 = vmatpush1.msra.mxu0 0.0
    %124 = vmatprep.subr.mxu0 0.0
    %125 = vmatpush1.msra.mxu0 0.0
    %126 = vmatprep.subr.mxu0 0.0
    %127 = vmatpush1.msra.mxu0 0.0
    %128 = vmatprep.subr.mxu0 0.0
    %129 = vmatpush1.msra.mxu0 0.0
    %130 = vmatprep.subr.mxu0 0.0
    %131 = vmatpush1.msra.mxu0 0.0
    %132 = vmatprep.subr.mxu0 0.0
    %133 = vmatpush1.msra.mxu0 0.0
    %134 = vmatprep.subr.mxu0 0.0
    %135 = vmatpush1.msra.mxu0 0.0
    %136 = vmatprep.subr.mxu0 0.0
    %137 = vmatpush1.msra.mxu0 0.0
    %138 = vmatprep.mubr.f32.mxu0 0.0
    %139 = vmatmul.mubr.f32.gmra.mrb[0].mxu0 %v72
    %v140 = vpop.f32.mrb[0].mxu0
    %v141 = vadd.f32 %v68, %v140
    %v142 = vpop.f32.mrb[0].mxu0
    %143 = vdwg.mxu0
    %v144 = vtanh.pop %v141
    %v145 = vld [vmem:[#allocation7] sm:$0xff]
    %v146 = vld [vmem:[#allocation7 + $0x8] sm:$0xff]
    %v147 = vld [vmem:[#allocation7 + $0x10] sm:$0xff]
    %v148 = vld [vmem:[#allocation7 + $0x18] sm:$0xff]
    %v149 = vld [vmem:[%s4] sm:$0x1]
    %v151 = vlaneseq
    %v152 = vshrl.u32 %v151, 7
    %v153 = vsub.s32 0, %v152
    %v154 = vrot.slane %v149, %v153
    %vm156 = vcmask 261120
    %v158 = vsel %vm156, %v144, 0
    %160 = vmatprep.subr.mxu0 0.0
    %161 = vmatpush1.msra.mxu0 %v145
    %162 = vmatprep.subr.mxu0 0.0
    %163 = vmatpush1.msra.mxu0 %v146
    %164 = vmatprep.subr.mxu0 0.0
    %165 = vmatpush1.msra.mxu0 %v147
    %166 = vmatprep.subr.mxu0 0.0
    %167 = vmatpush1.msra.mxu0 %v148
    %168 = vmatprep.subr.mxu0 0.0
    %169 = vmatpush1.msra.mxu0 0.0
    %170 = vmatprep.subr.mxu0 0.0
    %171 = vmatpush1.msra.mxu0 0.0
    %172 = vmatprep.subr.mxu0 0.0
    %173 = vmatpush1.msra.mxu0 0.0
    %174 = vmatprep.subr.mxu0 0.0
    %175 = vmatpush1.msra.mxu0 0.0
    %176 = vmatprep.subr.mxu0 0.0
    %177 = vmatpush1.msra.mxu0 0.0
    %178 = vmatprep.subr.mxu0 0.0
    %179 = vmatpush1.msra.mxu0 0.0
    %180 = vmatprep.subr.mxu0 0.0
    %181 = vmatpush1.msra.mxu0 0.0
    %182 = vmatprep.subr.mxu0 0.0
    %183 = vmatpush1.msra.mxu0 0.0
    %184 = vmatprep.subr.mxu0 0.0
    %185 = vmatpush1.msra.mxu0 0.0
    %186 = vmatprep.subr.mxu0 0.0
    %187 = vmatpush1.msra.mxu0 0.0
    %188 = vmatprep.subr.mxu0 0.0
    %189 = vmatpush1.msra.mxu0 0.0
    %190 = vmatprep.subr.mxu0 0.0
    %191 = vmatpush1.msra.mxu0 0.0
    %192 = vmatprep.subr.mxu0 0.0
    %193 = vmatpush1.msra.mxu0 0.0
    %194 = vmatprep.subr.mxu0 0.0
    %195 = vmatpush1.msra.mxu0 0.0
    %196 = vmatprep.subr.mxu0 0.0
    %197 = vmatpush1.msra.mxu0 0.0
    %198 = vmatprep.subr.mxu0 0.0
    %199 = vmatpush1.msra.mxu0 0.0
    %200 = vmatprep.subr.mxu0 0.0
    %201 = vmatpush1.msra.mxu0 0.0
    %202 = vmatprep.subr.mxu0 0.0
    %203 = vmatpush1.msra.mxu0 0.0
    %204 = vmatprep.subr.mxu0 0.0
    %205 = vmatpush1.msra.mxu0 0.0
    %206 = vmatprep.subr.mxu0 0.0
    %207 = vmatpush1.msra.mxu0 0.0
    %208 = vmatprep.subr.mxu0 0.0
    %209 = vmatpush1.msra.mxu0 0.0
    %210 = vmatprep.subr.mxu0 0.0
    %211 = vmatpush1.msra.mxu0 0.0
    %212 = vmatprep.subr.mxu0 0.0
    %213 = vmatpush1.msra.mxu0 0.0
    %214 = vmatprep.subr.mxu0 0.0
    %215 = vmatpush1.msra.mxu0 0.0
    %216 = vmatprep.subr.mxu0 0.0
    %217 = vmatpush1.msra.mxu0 0.0
    %218 = vmatprep.subr.mxu0 0.0
    %219 = vmatpush1.msra.mxu0 0.0
    %220 = vmatprep.subr.mxu0 0.0
    %221 = vmatpush1.msra.mxu0 0.0
    %222 = vmatprep.subr.mxu0 0.0
    %223 = vmatpush1.msra.mxu0 0.0
    %224 = vmatprep.mubr.f32.mxu0 0.0
    %225 = vmatmul.mubr.f32.gmra.mrb[0].mxu0 %v158
    %v226 = vpop.f32.mrb[0].mxu0
    %v227 = vadd.f32 %v154, %v226
    %v228 = vpop.f32.mrb[0].mxu0
    %229 = vdwg.mxu0
    %v230 = vtanh.pop %v227
    %231 = vst [vmem:[#allocation8] sm:$0x3] %v230
    // Predicated region
    $region34: #{tpu_custom_call.1} parent=1 // pred_check
      _
    $region35: #{tpu_custom_call.1} parent=1 // pred_check_branch
      %233 = sbr.rel (0) target = $region37
    $region36: #{tpu_custom_call.1} parent=1 // pred_region
      %s235 = ssub.s32 32, 32
      %236 = vsyncadd [#allocation4], %s235
      %s238 = sshll.u32 [#allocation8], 4
      %s239 = int_to_ptr.vmem [resolvable:$true] %s238
      %241 = dma.vmem_to_hbm [thread:$0]  %s239, 32, %s5, [#allocation4]
    $region37: #{tpu_custom_call.1} parent=1 // pred_fallthru
      _
    // Predicated region
    $region38: #{tpu_custom_call.1} parent=1 // pred_check
      _
    $region39: #{tpu_custom_call.1} parent=1 // pred_check_branch
      %243 = sbr.rel (0) target = $region41
    $region40: #{tpu_custom_call.1} parent=1 // pred_region
      %244 = dma.done [#allocation4], 32
    $region41: #{tpu_custom_call.1} parent=1 // pred_fallthru
      _
    %245 = vsyncpa [#allocation3], 1
    %246 = vsyncpa [#allocation6], 1
    %247 = vsyncpa [#allocation4], 1

</llo_original>
